<compile_context>
chip_gen: v6e
topology: v6e:2x2x1
jax: 0.10.0
libtpu: 0.0.40
codegen_flags: <defaults>
</compile_context>

<pallas_src>
import math

import numpy as np
import jax
import jax.numpy as jnp
from jax.experimental import pallas as pl
from jax.experimental.pallas import tpu as pltpu


# ----------------------------------------------------------------------------
# Pallas kernel: 2 network matmuls + ELU + abs, plus MXU-side gather/scatter
# for the Fp assembly and the out-of-range mask.  Operates on a (TBp, pf)
# batch tile of packed samples; weights / constant matrices are whole-array
# blocks resident in VMEM.
# ----------------------------------------------------------------------------
def bayes_fp_kernel(x_ref, w1_ref, b1_ref, w23_ref, b23_ref,
                    sa_ref, sb_ref, cb_ref, t_ref, out_ref):
    xp = x_ref[...]                                   # (TBp, pf) packed samples

    # --- Dense_Variational #1 + ELU (block-diagonal replicated weights) -----
    h = jnp.dot(xp, w1_ref[...], preferred_element_type=jnp.float32) + b1_ref[...]
    # ELU(alpha=1); clamp before exp so the unselected branch never hits inf.
    h = jnp.where(h > 0.0, h, jnp.exp(jnp.minimum(h, 0.0)) - 1.0)

    # --- folded Dense_Variational #2 + #3, |.| ; columns = [o0-cols | o1-cols]
    y = jnp.abs(jnp.dot(h, w23_ref[...], preferred_element_type=jnp.float32)
                + b23_ref[...])                       # (TBp, 2*PR)

    # --- gather x0 / x1 for every (sample, region) via constant 0/1 matmuls --
    a = jnp.dot(xp, sa_ref[...], preferred_element_type=jnp.float32)   # [x0 | x1]
    b = jnp.dot(xp, sb_ref[...], preferred_element_type=jnp.float32) + cb_ref[...]  # [x1 | 1]

    # prod = [plusI | minusI] = [o0*x0*x1 | o1*x1]
    prod = y * a * b                                  # (TBp, 2*PR)

    # --- scatter to output lanes with one signed placement matmul -----------
    # lane r*L+0 <- -plusI, r*L+1 <- plusI-minusI, r*L+2 <- minusI, rest 0
    res = jnp.dot(prod, t_ref[...], preferred_element_type=jnp.float32)  # (TBp, pf)

    # res[(x > 2) | (x < -1)] = 0.0
    oob = (xp > 2.0) | (xp < -1.0)
    out_ref[...] = jnp.where(oob, 0.0, res).astype(out_ref.dtype)


# ----------------------------------------------------------------------------
# Parameter setup (deterministic): replicates Dense_Variational init + make_z.
# ----------------------------------------------------------------------------
def init_dense_variational(key, in_features, out_features):
    k_w, k_b, k_zw, k_zb = jax.random.split(key, 4)
    # kaiming_uniform_(a=sqrt(5)) => bound = 1/sqrt(fan_in); same bound for bias
    bound = 1.0 / math.sqrt(in_features)
    w_mean = jax.random.uniform(k_w, (out_features, in_features), jnp.float32,
                                -bound, bound)
    w_std = jnp.full((out_features, in_features), 0.1, jnp.float32)
    b_mean = jax.random.uniform(k_b, (out_features,), jnp.float32, -bound, bound)
    b_std = jnp.full((out_features,), 0.1, jnp.float32)
    # make_z(): z ~ N(0, 1), sampled once deterministically here
    z_w = jax.random.normal(k_zw, (out_features, in_features), jnp.float32)
    z_b = jax.random.normal(k_zb, (out_features,), jnp.float32)
    w = w_mean + z_w * jnp.abs(w_std)   # (out, in), torch linear convention
    b = b_mean + z_b * jnp.abs(b_std)   # (out,)
    return w, b


def make_bayes_fp_params(key, n_regions=1, latent_dim=8, net_sizes=(20, 20)):
    k1, k2, k3 = jax.random.split(key, 3)
    w1, b1 = init_dense_variational(k1, n_regions * latent_dim, net_sizes[0])
    w2, b2 = init_dense_variational(k2, net_sizes[0], net_sizes[1])
    w3, b3 = init_dense_variational(k3, net_sizes[1], 2 * n_regions)
    return (w1, b1, w2, b2, w3, b3)


def _cdiv(a, b):
    return -(-a // b)


def _round_up(n, m):
    return _cdiv(n, m) * m


def _block_diag(block, p):
    """Block-diagonal matrix with p copies of `block` ((r,c) -> (p*r, p*c))."""
    r, c = block.shape
    eye = jnp.eye(p, dtype=block.dtype)
    return (eye[:, None, :, None] * block[None, :, None, :]).reshape(p * r, p * c)


# ----------------------------------------------------------------------------
# Wrapper: weight folding, lane-dense packing, gridded pallas_call over batch.
# ----------------------------------------------------------------------------
def bayes_fp_forward(x, params, *, block_rows=None):
    """x: (B, n_regions, latent_dim) float32. Returns same shape.
    (The PyTorch forward also takes `t`, which is unused in the computation.)
    """
    w1, b1, w2, b2, w3, b3 = params
    B, R, L = x.shape
    assert L >= 3, "Fp assembly needs latent_dim >= 3 (lanes 0..2 hold Fp)"
    rl = R * L
    H1 = w1.shape[0]

    # Samples packed per 128-lane row (contiguous reshape — free, no transpose).
    if 128 % rl == 0 and B % (128 // rl) == 0:
        P = 128 // rl
    else:
        P = 1                       # fallback: unpacked layout
    pf = P * rl
    PR = P * R
    Bp = B // P

    # --- fold layer 2 into the head (no nonlinearity between them) ----------
    #   y = (h @ w2^T + b2) @ w3^T + b3 = h @ (w2^T @ w3^T) + (b2 @ w3^T + b3)
    w1t = w1.T                                        # (rl, H1)
    w23 = w2.T @ w3.T                                 # (H1, 2R)
    b23 = b2 @ w3.T + b3                              # (2R,)
    w23_e, w23_o = w23[:, 0::2], w23[:, 1::2]         # o0 / o1 per region
    b23_e, b23_o = b23[0::2], b23[1::2]

    # --- per-sample block-diagonal replicated weights ------------------------
    w1_p = _block_diag(w1t, P)                        # (pf, P*H1)
    b1_p = jnp.tile(b1, P)[None, :]                   # (1, P*H1)
    w23_p = jnp.concatenate([_block_diag(w23_e, P), _block_diag(w23_o, P)],
                            axis=1)                   # (P*H1, 2*PR)
    b23_p = jnp.concatenate([jnp.tile(b23_e, P), jnp.tile(b23_o, P)])[None, :]

    # --- constant gather / scatter matrices (assembly runs on the idle MXU) --
    sa = np.zeros((pf, 2 * PR), np.float32)     # xp @ sa        -> [x0 | x1]
    sb = np.zeros((pf, 2 * PR), np.float32)     # xp @ sb + cb   -> [x1 | 1 ]
    cb = np.zeros((1, 2 * PR), np.float32)
    tmat = np.zeros((2 * PR, pf), np.float32)   # signed placement of Fp lanes
    for p in range(P):
        for r in range(R):
            q = p * R + r
            base = p * rl + r * L
            sa[base + 0, q] = 1.0
            sa[base + 1, PR + q] = 1.0
            sb[base + 1, q] = 1.0
            cb[0, PR + q] = 1.0
            tmat[q, base + 0] = -1.0            # -plusI
            tmat[q, base + 1] = 1.0             # +plusI
            tmat[PR + q, base + 1] = -1.0       # -minusI
            tmat[PR + q, base + 2] = 1.0        # +minusI

    xp = x.reshape(Bp, pf)    # free, contiguous (P consecutive samples per row)

    # --- batch tiling: ~512 KiB payload per block, >=2 blocks when possible --
    if block_rows is None:
        rows_target = max(8, (512 * 1024) // (pf * 4))
        rows_cap = max(8, _round_up(_cdiv(Bp, 2), 8))   # keep >=2 blocks (v7x)
        block_rows = min(_round_up(rows_target, 8), rows_cap)
    tbp = block_rows if block_rows < Bp else Bp
    grid = (_cdiv(Bp, tbp),)   # ragged last block OK: no pad, OOB writes dropped

    out = pl.pallas_call(
        bayes_fp_kernel,
        out_shape=jax.ShapeDtypeStruct((Bp, pf), jnp.float32),
        grid_spec=pltpu.PrefetchScalarGridSpec(
            num_scalar_prefetch=0,
            grid=grid,
            in_specs=[
                pl.BlockSpec((tbp, pf), lambda i: (i, 0)),        # packed x tile
                pl.BlockSpec((pf, P * H1), lambda i: (0, 0)),     # w1 (resident)
                pl.BlockSpec((1, P * H1), lambda i: (0, 0)),      # b1
                pl.BlockSpec((P * H1, 2 * PR), lambda i: (0, 0)), # folded head W
                pl.BlockSpec((1, 2 * PR), lambda i: (0, 0)),      # folded head b
                pl.BlockSpec((pf, 2 * PR), lambda i: (0, 0)),     # gather x0|x1
                pl.BlockSpec((pf, 2 * PR), lambda i: (0, 0)),     # gather x1|0
                pl.BlockSpec((1, 2 * PR), lambda i: (0, 0)),      # const 0|1
                pl.BlockSpec((2 * PR, pf), lambda i: (0, 0)),     # placement
            ],
            out_specs=pl.BlockSpec((tbp, pf), lambda i: (i, 0)),
        ),
        compiler_params=pltpu.CompilerParams(
            # Batch tiles are independent -> parallel (uses both TCs on v7x).
            dimension_semantics=("parallel",),
            # Few MiB actually used; well under v7x's 64 MiB physical VMEM.
            vmem_limit_bytes=32 * 1024 * 1024,
        ),
    )(xp, w1_p, b1_p, w23_p, b23_p,
      jnp.asarray(sa), jnp.asarray(sb), jnp.asarray(cb), jnp.asarray(tmat))

    return out.reshape(B, R, L)
    # TODO(synk): self.params tracking / posterior() / get_kl() are Python-side
    # training utilities (KL of the variational posterior), not part of the
    # forward tensor computation, so they are not expressed in the kernel.


# ----------------------------------------------------------------------------
# Pure-JAX reference (mirrors the PyTorch forward, unfused) for correctness.
# ----------------------------------------------------------------------------
def bayes_fp_reference(x, params):
    w1, b1, w2, b2, w3, b3 = params
    B, R, L = x.shape
    out = x.reshape(B, R * L)
    out = out @ w1.T + b1
    out = jnp.where(out > 0.0, out, jnp.expm1(jnp.minimum(out, 0.0)))
    out = out @ w2.T + b2
    out = out @ w3.T + b3
    out = jnp.abs(out).reshape(B, R, 2)
    plus_i = out[..., 0] * x[..., 0] * x[..., 1]
    minus_i = out[..., 1] * x[..., 1]
    fp = jnp.stack([-plus_i, plus_i - minus_i, minus_i], axis=-1)
    res = jnp.concatenate([fp, jnp.zeros_like(x[..., 3:])], axis=-1)
    mask = (x > 2.0) | (x < -1.0)
    return jnp.where(mask, 0.0, res)


if __name__ == "__main__":
    net_sizes = (20, 20)
    k1, k2, k3, k4 = jax.random.split(jax.random.PRNGKey(0), 4)

    # Case 1: default module config (R=1, L=8) -> packed lane-dense path
    # (16 samples per 128-lane row), 2 batch blocks (exercises the grid).
    B, R, L = 256, 1, 8
    params = make_bayes_fp_params(k1, n_regions=R, latent_dim=L,
                                  net_sizes=net_sizes)
    # Input range exercises both sides of the out-of-range mask.
    x = jax.random.uniform(k2, (B, R, L), jnp.float32, minval=-1.5, maxval=2.5)
    res = bayes_fp_forward(x, params)
    jax.block_until_ready(res)
    ref = bayes_fp_reference(x, params)
    assert res.shape == (B, R, L)
    assert jnp.allclose(res, ref, atol=1e-3, rtol=1e-3), "mismatch (packed path)"

    # Case 2: R*L = 10 does not divide 128 -> unpacked fallback path, 2 blocks.
    B2, R2, L2 = 32, 1, 10
    params2 = make_bayes_fp_params(k3, n_regions=R2, latent_dim=L2,
                                   net_sizes=net_sizes)
    x2 = jax.random.uniform(k4, (B2, R2, L2), jnp.float32, minval=-1.5, maxval=2.5)
    res2 = bayes_fp_forward(x2, params2)
    jax.block_until_ready(res2)
    ref2 = bayes_fp_reference(x2, params2)
    assert res2.shape == (B2, R2, L2)
    assert jnp.allclose(res2, ref2, atol=1e-3, rtol=1e-3), "mismatch (fallback)"

    print("KERNEL_OK")
</pallas_src>

<mosaic_0001>
module attributes {stable_mosaic.version = 11 : i64} {
  func.func @bayes_fp_kernel(%arg0: i32, %arg1: memref<8x128xf32, #tpu.memory_space<vmem>>, %arg2: memref<128x320xf32, #tpu.memory_space<vmem>>, %arg3: memref<1x320xf32, #tpu.memory_space<vmem>>, %arg4: memref<320x32xf32, #tpu.memory_space<vmem>>, %arg5: memref<1x32xf32, #tpu.memory_space<vmem>>, %arg6: memref<128x32xf32, #tpu.memory_space<vmem>>, %arg7: memref<128x32xf32, #tpu.memory_space<vmem>>, %arg8: memref<1x32xf32, #tpu.memory_space<vmem>>, %arg9: memref<32x128xf32, #tpu.memory_space<vmem>>, %arg10: memref<8x128xf32, #tpu.memory_space<vmem>>) attributes {dimension_semantics = [#tpu.dimension_semantics<parallel>], iteration_bounds = array<i64: 2>, scalar_prefetch = 0 : i64, scratch_operands = 0 : i64, tpu.core_type = #tpu.core_type<tc>, window_params = [{transform_indices = @transform_0, window_bounds = array<i64: 8, 128>}, {pipeline_mode = #tpu.pipeline_mode<synchronous>, transform_indices = @transform_1, window_bounds = array<i64: 128, 320>}, {pipeline_mode = #tpu.pipeline_mode<synchronous>, transform_indices = @transform_2, window_bounds = array<i64: 1, 320>}, {pipeline_mode = #tpu.pipeline_mode<synchronous>, transform_indices = @transform_3, window_bounds = array<i64: 320, 32>}, {pipeline_mode = #tpu.pipeline_mode<synchronous>, transform_indices = @transform_4, window_bounds = array<i64: 1, 32>}, {pipeline_mode = #tpu.pipeline_mode<synchronous>, transform_indices = @transform_5, window_bounds = array<i64: 128, 32>}, {pipeline_mode = #tpu.pipeline_mode<synchronous>, transform_indices = @transform_6, window_bounds = array<i64: 128, 32>}, {pipeline_mode = #tpu.pipeline_mode<synchronous>, transform_indices = @transform_7, window_bounds = array<i64: 1, 32>}, {pipeline_mode = #tpu.pipeline_mode<synchronous>, transform_indices = @transform_8, window_bounds = array<i64: 32, 128>}, {transform_indices = @transform_9, window_bounds = array<i64: 8, 128>}]} {
    %c0 = arith.constant 0 : index
    %c0_0 = arith.constant 0 : index
    %0 = vector.load %arg1[%c0, %c0_0] : memref<8x128xf32, #tpu.memory_space<vmem>>, vector<8x128xf32>
    %c0_1 = arith.constant 0 : index
    %c0_2 = arith.constant 0 : index
    %1 = vector.load %arg2[%c0_1, %c0_2] : memref<128x320xf32, #tpu.memory_space<vmem>>, vector<128x320xf32>
    %cst = arith.constant dense<0.000000e+00> : vector<8x320xf32>
    %2 = tpu.matmul %0, %1, %cst {dimension_numbers = #tpu.dot_dimension_numbers<[1], [0], [0], [1], [0, 0, 1, 1], [], []>} : vector<8x128xf32>, vector<128x320xf32>, vector<8x320xf32> -> vector<8x320xf32>
    %c0_3 = arith.constant 0 : index
    %c0_4 = arith.constant 0 : index
    %3 = vector.load %arg3[%c0_3, %c0_4] : memref<1x320xf32, #tpu.memory_space<vmem>>, vector<1x320xf32>
    %4 = vector.broadcast %3 : vector<1x320xf32> to vector<8x320xf32>
    %5 = arith.addf %2, %4 : vector<8x320xf32>
    %cst_5 = arith.constant 0.000000e+00 : f32
    %6 = vector.broadcast %cst_5 : f32 to vector<8x320xf32>
    %7 = arith.cmpf ogt, %5, %6 : vector<8x320xf32>
    %cst_6 = arith.constant 0.000000e+00 : f32
    %8 = vector.broadcast %cst_6 : f32 to vector<8x320xf32>
    %9 = arith.minimumf %5, %8 : vector<8x320xf32>
    %10 = math.exp %9 : vector<8x320xf32>
    %cst_7 = arith.constant 1.000000e+00 : f32
    %11 = vector.broadcast %cst_7 : f32 to vector<8x320xf32>
    %12 = arith.subf %10, %11 : vector<8x320xf32>
    %13 = arith.select %7, %5, %12 : vector<8x320xi1>, vector<8x320xf32>
    %c0_8 = arith.constant 0 : index
    %c0_9 = arith.constant 0 : index
    %14 = vector.load %arg4[%c0_8, %c0_9] : memref<320x32xf32, #tpu.memory_space<vmem>>, vector<320x32xf32>
    %cst_10 = arith.constant dense<0.000000e+00> : vector<8x32xf32>
    %15 = tpu.matmul %13, %14, %cst_10 {dimension_numbers = #tpu.dot_dimension_numbers<[1], [0], [0], [1], [0, 0, 1, 1], [], []>} : vector<8x320xf32>, vector<320x32xf32>, vector<8x32xf32> -> vector<8x32xf32>
    %c0_11 = arith.constant 0 : index
    %c0_12 = arith.constant 0 : index
    %16 = vector.load %arg5[%c0_11, %c0_12] : memref<1x32xf32, #tpu.memory_space<vmem>>, vector<1x32xf32>
    %17 = vector.broadcast %16 : vector<1x32xf32> to vector<8x32xf32>
    %18 = arith.addf %15, %17 : vector<8x32xf32>
    %19 = math.absf %18 : vector<8x32xf32>
    %c0_13 = arith.constant 0 : index
    %c0_14 = arith.constant 0 : index
    %20 = vector.load %arg6[%c0_13, %c0_14] : memref<128x32xf32, #tpu.memory_space<vmem>>, vector<128x32xf32>
    %cst_15 = arith.constant dense<0.000000e+00> : vector<8x32xf32>
    %21 = tpu.matmul %0, %20, %cst_15 {dimension_numbers = #tpu.dot_dimension_numbers<[1], [0], [0], [1], [0, 0, 1, 1], [], []>} : vector<8x128xf32>, vector<128x32xf32>, vector<8x32xf32> -> vector<8x32xf32>
    %c0_16 = arith.constant 0 : index
    %c0_17 = arith.constant 0 : index
    %22 = vector.load %arg7[%c0_16, %c0_17] : memref<128x32xf32, #tpu.memory_space<vmem>>, vector<128x32xf32>
    %cst_18 = arith.constant dense<0.000000e+00> : vector<8x32xf32>
    %23 = tpu.matmul %0, %22, %cst_18 {dimension_numbers = #tpu.dot_dimension_numbers<[1], [0], [0], [1], [0, 0, 1, 1], [], []>} : vector<8x128xf32>, vector<128x32xf32>, vector<8x32xf32> -> vector<8x32xf32>
    %c0_19 = arith.constant 0 : index
    %c0_20 = arith.constant 0 : index
    %24 = vector.load %arg8[%c0_19, %c0_20] : memref<1x32xf32, #tpu.memory_space<vmem>>, vector<1x32xf32>
    %25 = vector.broadcast %24 : vector<1x32xf32> to vector<8x32xf32>
    %26 = arith.addf %23, %25 : vector<8x32xf32>
    %27 = arith.mulf %19, %21 : vector<8x32xf32>
    %28 = arith.mulf %27, %26 : vector<8x32xf32>
    %c0_21 = arith.constant 0 : index
    %c0_22 = arith.constant 0 : index
    %29 = vector.load %arg9[%c0_21, %c0_22] : memref<32x128xf32, #tpu.memory_space<vmem>>, vector<32x128xf32>
    %cst_23 = arith.constant dense<0.000000e+00> : vector<8x128xf32>
    %30 = tpu.matmul %28, %29, %cst_23 {dimension_numbers = #tpu.dot_dimension_numbers<[1], [0], [0], [1], [0, 0, 1, 1], [], []>} : vector<8x32xf32>, vector<32x128xf32>, vector<8x128xf32> -> vector<8x128xf32>
    %cst_24 = arith.constant 2.000000e+00 : f32
    %31 = vector.broadcast %cst_24 : f32 to vector<8x128xf32>
    %32 = arith.cmpf ogt, %0, %31 : vector<8x128xf32>
    %cst_25 = arith.constant -1.000000e+00 : f32
    %33 = vector.broadcast %cst_25 : f32 to vector<8x128xf32>
    %34 = arith.cmpf olt, %0, %33 : vector<8x128xf32>
    %35 = arith.ori %32, %34 : vector<8x128xi1>
    %cst_26 = arith.constant 0.000000e+00 : f32
    %36 = vector.broadcast %cst_26 : f32 to vector<8x128xf32>
    %37 = arith.select %35, %36, %30 : vector<8x128xi1>, vector<8x128xf32>
    %c0_27 = arith.constant 0 : index
    %c0_28 = arith.constant 0 : index
    %38 = vector.load %arg10[%c0_27, %c0_28] : memref<8x128xf32, #tpu.memory_space<vmem>>, vector<8x128xf32>
    tpu.vector_store %arg10[%c0_27, %c0_28], %37 {strides = array<i32>} : memref<8x128xf32, #tpu.memory_space<vmem>>, vector<8x128xf32>,
    return
  }
  func.func @transform_0(%arg0: i32) -> (i32, i32) {
    %c0_i32 = arith.constant 0 : i32
    %c0_i32_0 = arith.constant 0 : i32
    return %arg0, %c0_i32 : i32, i32
  }
  func.func @transform_1(%arg0: i32) -> (i32, i32) {
    %c0_i32 = arith.constant 0 : i32
    %c0_i32_0 = arith.constant 0 : i32
    %c0_i32_1 = arith.constant 0 : i32
    return %c0_i32, %c0_i32_0 : i32, i32
  }
  func.func @transform_2(%arg0: i32) -> (i32, i32) {
    %c0_i32 = arith.constant 0 : i32
    %c0_i32_0 = arith.constant 0 : i32
    %c0_i32_1 = arith.constant 0 : i32
    return %c0_i32, %c0_i32_0 : i32, i32
  }
  func.func @transform_3(%arg0: i32) -> (i32, i32) {
    %c0_i32 = arith.constant 0 : i32
    %c0_i32_0 = arith.constant 0 : i32
    %c0_i32_1 = arith.constant 0 : i32
    return %c0_i32, %c0_i32_0 : i32, i32
  }
  func.func @transform_4(%arg0: i32) -> (i32, i32) {
    %c0_i32 = arith.constant 0 : i32
    %c0_i32_0 = arith.constant 0 : i32
    %c0_i32_1 = arith.constant 0 : i32
    return %c0_i32, %c0_i32_0 : i32, i32
  }
  func.func @transform_5(%arg0: i32) -> (i32, i32) {
    %c0_i32 = arith.constant 0 : i32
    %c0_i32_0 = arith.constant 0 : i32
    %c0_i32_1 = arith.constant 0 : i32
    return %c0_i32, %c0_i32_0 : i32, i32
  }
  func.func @transform_6(%arg0: i32) -> (i32, i32) {
    %c0_i32 = arith.constant 0 : i32
    %c0_i32_0 = arith.constant 0 : i32
    %c0_i32_1 = arith.constant 0 : i32
    return %c0_i32, %c0_i32_0 : i32, i32
  }
  func.func @transform_7(%arg0: i32) -> (i32, i32) {
    %c0_i32 = arith.constant 0 : i32
    %c0_i32_0 = arith.constant 0 : i32
    %c0_i32_1 = arith.constant 0 : i32
    return %c0_i32, %c0_i32_0 : i32, i32
  }
  func.func @transform_8(%arg0: i32) -> (i32, i32) {
    %c0_i32 = arith.constant 0 : i32
    %c0_i32_0 = arith.constant 0 : i32
    %c0_i32_1 = arith.constant 0 : i32
    return %c0_i32, %c0_i32_0 : i32, i32
  }
  func.func @transform_9(%arg0: i32) -> (i32, i32) {
    %c0_i32 = arith.constant 0 : i32
    %c0_i32_0 = arith.constant 0 : i32
    return %arg0, %c0_i32 : i32, i32
  }
}

</mosaic_0001>

<llo_original>
// kernel: tpu_custom_call.1
$region0: #{tpu_custom_call.1}
  #allocation0 [shape = 'u32[]', space=smem, size = 0x4, offset = 0x4, fixed_abs, tag = 'smem constant byte address 0x4 - core index']
  #allocation1 [shape = 'u32[144,128]{1,0:T(1,128)}', space=vmem, size = 0x12000, scoped, tag = 'internal scratch']
  %s0 = inlined_call_operand.vmem [shape: f32[16,128], index: 0, kind: input, shape index: {}]
  %s1 = inlined_call_operand.vmem [shape: f32[128,320], index: 1, kind: input, shape index: {}]
  %s2 = inlined_call_operand.vmem [shape: f32[1,320], index: 2, kind: input, shape index: {}]
  %s3 = inlined_call_operand.vmem [shape: f32[320,32], index: 3, kind: input, shape index: {}]
  %s4 = inlined_call_operand.vmem [shape: f32[1,32], index: 4, kind: input, shape index: {}]
  %s5 = inlined_call_operand.vmem [shape: f32[128,32], index: 5, kind: input, shape index: {}]
  %s6 = inlined_call_operand.vmem [shape: f32[128,32], index: 6, kind: input, shape index: {}]
  %s7 = inlined_call_operand.vmem [shape: f32[1,32], index: 7, kind: input, shape index: {}]
  %s8 = inlined_call_operand.vmem [shape: f32[32,128], index: 8, kind: input, shape index: {}]
  %s9 = inlined_call_operand.hbm [shape: f32[16,128], index: 9, kind: output, shape index: {}]
  %s10 = sld [smem:[#allocation0]]
  $region69: #{tpu_custom_call.1} parent=0
    _
  %s12 = ssub.s32 1, %s10
  %s13 = scalar_select 0, %s12, %s10
  $region1: #{tpu_custom_call.1} parent=0
    #allocation2 [shape = 'u8[8192]{0}', space=vmem, size = 0x2000, scoped, tag = 'output window, operand 0']
    #allocation3 [shape = 's32[2]{0}', space=sflag, size = 0x8, scoped, tag = 'scoped memory for tpu_custom_call.1']
    %14 = vsyncpa [#allocation3], 0
    %s15 = scalar_lea.sflag [#allocation3], 1
    %16 = vsyncpa %s15, 0
    loop: start=0, step=1, limit=4
    $region2: #{tpu_custom_call.1} parent=1 // loop_pre_header
      _
    $region3: #{tpu_custom_call.1} parent=1 // loop_header
      %s18 = sphi 0, %s22
      %p19 = scmp.ge.s32.totalorder %s18, 4
      %s28 = sphi 0, %s30
      %s31 = sphi 0, %s28
      %s32 = sphi 0, %s31
      %s48 = sphi 0, %s32
      %s52 = sphi 0, %s52
      %s54 = sphi 0, %s52
      %s55 = sphi 0, %s54
      %s69 = sphi 0, %s55
      %s73 = sphi 0, %s73
      %s75 = sphi 0, %s73
      %s76 = sphi 0, %s75
      %s90 = sphi 0, %s76
      %s94 = sphi 0, %s94
      %s96 = sphi 0, %s94
      %s97 = sphi 0, %s96
      %s111 = sphi 0, %s97
      %s115 = sphi 0, %s115
      %s117 = sphi 0, %s115
      %s118 = sphi 0, %s117
      %s132 = sphi 0, %s118
      %s136 = sphi 0, %s136
      %s138 = sphi 0, %s136
      %s139 = sphi 0, %s138
      %s153 = sphi 0, %s139
      %s157 = sphi 0, %s157
      %s159 = sphi 0, %s157
      %s160 = sphi 0, %s159
      %s174 = sphi 0, %s160
      %s178 = sphi 0, %s178
      %s180 = sphi 0, %s178
      %s181 = sphi 0, %s180
      %s195 = sphi 0, %s181
      %s199 = sphi 0, %s199
      %s201 = sphi 0, %s199
      %s202 = sphi 0, %s201
      %s216 = sphi 0, %s202
      %s222 = sphi 0, %s224
      %s225 = sphi 0, %s222
      %s226 = sphi 0, %s225
      %s242 = sphi 0, %s226
    $region4: #{tpu_custom_call.1} parent=1 // loop_header_branch
      %21 = sbr.rel (%p19) target = $region8
    $region5: #{tpu_custom_call.1} parent=1 // loop_body
      %s23 = ssub.s32 %s18, 1
      %s24 = ssub.s32 %s18, 2
      %s25 = sadd.s32 %s18, 1
      %s26 = ssub.s32 %s18, %s25
      %p27 = scmp.eq.s32.totalorder %s26, 0
      %s29 = sadd.s32 %s28, 1
      %s30 = scalar_select %p27, %s28, %s29
      %p33 = pneg %p27
      %p34 = scmp.eq.s32.totalorder %s18, 1
      %p35 = por %p33, %p34
      %p36 = scmp.ne.s32.totalorder %s28, %s31
      %p37 = scmp.eq.s32.totalorder %s18, 0
      %p38 = por %p36, %p37
      %p39 = scmp.ne.s32.totalorder %s28, %s31
      %p40 = scmp.eq.s32.totalorder %s23, 1
      %p41 = por %p39, %p40
      %p42 = scmp.ne.s32.totalorder %s31, %s32
      %p43 = scmp.eq.s32.totalorder %s23, 0
      %p44 = por %p42, %p43
      %p45 = scmp.ne.s32.totalorder %s31, %s32
      %p46 = scmp.eq.s32.totalorder %s24, 1
      %p47 = por %p45, %p46
      %p49 = scmp.ne.s32.totalorder %s32, %s48
      %p50 = scmp.eq.s32.totalorder %s24, 0
      %p51 = por %p49, %p50
      %s53 = sadd.s32 %s52, 1
      %p56 = scmp.eq.s32.totalorder %s18, 1
      %p57 = scmp.ne.s32.totalorder %s52, %s54
      %p58 = scmp.eq.s32.totalorder %s18, 0
      %p59 = por %p57, %p58
      %p60 = scmp.ne.s32.totalorder %s52, %s54
      %p61 = scmp.eq.s32.totalorder %s23, 1
      %p62 = por %p60, %p61
      %p63 = scmp.ne.s32.totalorder %s54, %s55
      %p64 = scmp.eq.s32.totalorder %s23, 0
      %p65 = por %p63, %p64
      %p66 = scmp.ne.s32.totalorder %s54, %s55
      %p67 = scmp.eq.s32.totalorder %s24, 1
      %p68 = por %p66, %p67
      %p70 = scmp.ne.s32.totalorder %s55, %s69
      %p71 = scmp.eq.s32.totalorder %s24, 0
      %p72 = por %p70, %p71
      %s74 = sadd.s32 %s73, 1
      %p77 = scmp.eq.s32.totalorder %s18, 1
      %p78 = scmp.ne.s32.totalorder %s73, %s75
      %p79 = scmp.eq.s32.totalorder %s18, 0
      %p80 = por %p78, %p79
      %p81 = scmp.ne.s32.totalorder %s73, %s75
      %p82 = scmp.eq.s32.totalorder %s23, 1
      %p83 = por %p81, %p82
      %p84 = scmp.ne.s32.totalorder %s75, %s76
      %p85 = scmp.eq.s32.totalorder %s23, 0
      %p86 = por %p84, %p85
      %p87 = scmp.ne.s32.totalorder %s75, %s76
      %p88 = scmp.eq.s32.totalorder %s24, 1
      %p89 = por %p87, %p88
      %p91 = scmp.ne.s32.totalorder %s76, %s90
      %p92 = scmp.eq.s32.totalorder %s24, 0
      %p93 = por %p91, %p92
      %s95 = sadd.s32 %s94, 1
      %p98 = scmp.eq.s32.totalorder %s18, 1
      %p99 = scmp.ne.s32.totalorder %s94, %s96
      %p100 = scmp.eq.s32.totalorder %s18, 0
      %p101 = por %p99, %p100
      %p102 = scmp.ne.s32.totalorder %s94, %s96
      %p103 = scmp.eq.s32.totalorder %s23, 1
      %p104 = por %p102, %p103
      %p105 = scmp.ne.s32.totalorder %s96, %s97
      %p106 = scmp.eq.s32.totalorder %s23, 0
      %p107 = por %p105, %p106
      %p108 = scmp.ne.s32.totalorder %s96, %s97
      %p109 = scmp.eq.s32.totalorder %s24, 1
      %p110 = por %p108, %p109
      %p112 = scmp.ne.s32.totalorder %s97, %s111
      %p113 = scmp.eq.s32.totalorder %s24, 0
      %p114 = por %p112, %p113
      %s116 = sadd.s32 %s115, 1
      %p119 = scmp.eq.s32.totalorder %s18, 1
      %p120 = scmp.ne.s32.totalorder %s115, %s117
      %p121 = scmp.eq.s32.totalorder %s18, 0
      %p122 = por %p120, %p121
      %p123 = scmp.ne.s32.totalorder %s115, %s117
      %p124 = scmp.eq.s32.totalorder %s23, 1
      %p125 = por %p123, %p124
      %p126 = scmp.ne.s32.totalorder %s117, %s118
      %p127 = scmp.eq.s32.totalorder %s23, 0
      %p128 = por %p126, %p127
      %p129 = scmp.ne.s32.totalorder %s117, %s118
      %p130 = scmp.eq.s32.totalorder %s24, 1
      %p131 = por %p129, %p130
      %p133 = scmp.ne.s32.totalorder %s118, %s132
      %p134 = scmp.eq.s32.totalorder %s24, 0
      %p135 = por %p133, %p134
      %s137 = sadd.s32 %s136, 1
      %p140 = scmp.eq.s32.totalorder %s18, 1
      %p141 = scmp.ne.s32.totalorder %s136, %s138
      %p142 = scmp.eq.s32.totalorder %s18, 0
      %p143 = por %p141, %p142
      %p144 = scmp.ne.s32.totalorder %s136, %s138
      %p145 = scmp.eq.s32.totalorder %s23, 1
      %p146 = por %p144, %p145
      %p147 = scmp.ne.s32.totalorder %s138, %s139
      %p148 = scmp.eq.s32.totalorder %s23, 0
      %p149 = por %p147, %p148
      %p150 = scmp.ne.s32.totalorder %s138, %s139
      %p151 = scmp.eq.s32.totalorder %s24, 1
      %p152 = por %p150, %p151
      %p154 = scmp.ne.s32.totalorder %s139, %s153
      %p155 = scmp.eq.s32.totalorder %s24, 0
      %p156 = por %p154, %p155
      %s158 = sadd.s32 %s157, 1
      %p161 = scmp.eq.s32.totalorder %s18, 1
      %p162 = scmp.ne.s32.totalorder %s157, %s159
      %p163 = scmp.eq.s32.totalorder %s18, 0
      %p164 = por %p162, %p163
      %p165 = scmp.ne.s32.totalorder %s157, %s159
      %p166 = scmp.eq.s32.totalorder %s23, 1
      %p167 = por %p165, %p166
      %p168 = scmp.ne.s32.totalorder %s159, %s160
      %p169 = scmp.eq.s32.totalorder %s23, 0
      %p170 = por %p168, %p169
      %p171 = scmp.ne.s32.totalorder %s159, %s160
      %p172 = scmp.eq.s32.totalorder %s24, 1
      %p173 = por %p171, %p172
      %p175 = scmp.ne.s32.totalorder %s160, %s174
      %p176 = scmp.eq.s32.totalorder %s24, 0
      %p177 = por %p175, %p176
      %s179 = sadd.s32 %s178, 1
      %p182 = scmp.eq.s32.totalorder %s18, 1
      %p183 = scmp.ne.s32.totalorder %s178, %s180
      %p184 = scmp.eq.s32.totalorder %s18, 0
      %p185 = por %p183, %p184
      %p186 = scmp.ne.s32.totalorder %s178, %s180
      %p187 = scmp.eq.s32.totalorder %s23, 1
      %p188 = por %p186, %p187
      %p189 = scmp.ne.s32.totalorder %s180, %s181
      %p190 = scmp.eq.s32.totalorder %s23, 0
      %p191 = por %p189, %p190
      %p192 = scmp.ne.s32.totalorder %s180, %s181
      %p193 = scmp.eq.s32.totalorder %s24, 1
      %p194 = por %p192, %p193
      %p196 = scmp.ne.s32.totalorder %s181, %s195
      %p197 = scmp.eq.s32.totalorder %s24, 0
      %p198 = por %p196, %p197
      %s200 = sadd.s32 %s199, 1
      %p203 = scmp.eq.s32.totalorder %s18, 1
      %p204 = scmp.ne.s32.totalorder %s199, %s201
      %p205 = scmp.eq.s32.totalorder %s18, 0
      %p206 = por %p204, %p205
      %p207 = scmp.ne.s32.totalorder %s199, %s201
      %p208 = scmp.eq.s32.totalorder %s23, 1
      %p209 = por %p207, %p208
      %p210 = scmp.ne.s32.totalorder %s201, %s202
      %p211 = scmp.eq.s32.totalorder %s23, 0
      %p212 = por %p210, %p211
      %p213 = scmp.ne.s32.totalorder %s201, %s202
      %p214 = scmp.eq.s32.totalorder %s24, 1
      %p215 = por %p213, %p214
      %p217 = scmp.ne.s32.totalorder %s202, %s216
      %p218 = scmp.eq.s32.totalorder %s24, 0
      %p219 = por %p217, %p218
      %s220 = ssub.s32 %s18, %s25
      %p221 = scmp.eq.s32.totalorder %s220, 0
      %s223 = sadd.s32 %s222, 1
      %s224 = scalar_select %p221, %s222, %s223
      %p227 = pneg %p221
      %p228 = scmp.eq.s32.totalorder %s18, 1
      %p229 = por %p227, %p228
      %p230 = scmp.ne.s32.totalorder %s222, %s225
      %p231 = scmp.eq.s32.totalorder %s18, 0
      %p232 = por %p230, %p231
      %p233 = scmp.ne.s32.totalorder %s222, %s225
      %p234 = scmp.eq.s32.totalorder %s23, 1
      %p235 = por %p233, %p234
      %p236 = scmp.ne.s32.totalorder %s225, %s226
      %p237 = scmp.eq.s32.totalorder %s23, 0
      %p238 = por %p236, %p237
      %p239 = scmp.ne.s32.totalorder %s225, %s226
      %p240 = scmp.eq.s32.totalorder %s24, 1
      %p241 = por %p239, %p240
      %p243 = scmp.ne.s32.totalorder %s226, %s242
      %p244 = scmp.eq.s32.totalorder %s24, 0
      %p245 = por %p243, %p244
      %p246 = scmp.le.s32.totalorder 1, %s18
      %p247 = scmp.lt.s32.totalorder %s18, 3
      %p248 = pnand %p246, %p247
      %p249 = pneg %p248
      // Predicated region
      $region9: #{tpu_custom_call.1} parent=5 // pred_check
        _
      $region10: #{tpu_custom_call.1} parent=5 // pred_check_branch
        %251 = sbr.rel (%p248) target = $region12
      $region11: #{tpu_custom_call.1} parent=5 // pred_region
        %s252 = ssub.s32 %s18, 1
        // Predicated region
        $region13: #{tpu_custom_call.1} parent=11 // pred_check
          %p253 = pneg %p65
        $region14: #{tpu_custom_call.1} parent=11 // pred_check_branch
          %255 = sbr.rel (%p253) target = $region16
        $region15: #{tpu_custom_call.1} parent=11 // pred_region
          _
        $region16: #{tpu_custom_call.1} parent=11 // pred_fallthru
          _
        // Predicated region
        $region17: #{tpu_custom_call.1} parent=11 // pred_check
          %p256 = pneg %p86
        $region18: #{tpu_custom_call.1} parent=11 // pred_check_branch
          %258 = sbr.rel (%p256) target = $region20
        $region19: #{tpu_custom_call.1} parent=11 // pred_region
          _
        $region20: #{tpu_custom_call.1} parent=11 // pred_fallthru
          _
        // Predicated region
        $region21: #{tpu_custom_call.1} parent=11 // pred_check
          %p259 = pneg %p107
        $region22: #{tpu_custom_call.1} parent=11 // pred_check_branch
          %261 = sbr.rel (%p259) target = $region24
        $region23: #{tpu_custom_call.1} parent=11 // pred_region
          _
        $region24: #{tpu_custom_call.1} parent=11 // pred_fallthru
          _
        // Predicated region
        $region25: #{tpu_custom_call.1} parent=11 // pred_check
          %p262 = pneg %p128
        $region26: #{tpu_custom_call.1} parent=11 // pred_check_branch
          %264 = sbr.rel (%p262) target = $region28
        $region27: #{tpu_custom_call.1} parent=11 // pred_region
          _
        $region28: #{tpu_custom_call.1} parent=11 // pred_fallthru
          _
        // Predicated region
        $region29: #{tpu_custom_call.1} parent=11 // pred_check
          %p265 = pneg %p149
        $region30: #{tpu_custom_call.1} parent=11 // pred_check_branch
          %267 = sbr.rel (%p265) target = $region32
        $region31: #{tpu_custom_call.1} parent=11 // pred_region
          _
        $region32: #{tpu_custom_call.1} parent=11 // pred_fallthru
          _
        // Predicated region
        $region33: #{tpu_custom_call.1} parent=11 // pred_check
          %p268 = pneg %p170
        $region34: #{tpu_custom_call.1} parent=11 // pred_check_branch
          %270 = sbr.rel (%p268) target = $region36
        $region35: #{tpu_custom_call.1} parent=11 // pred_region
          _
        $region36: #{tpu_custom_call.1} parent=11 // pred_fallthru
          _
        // Predicated region
        $region37: #{tpu_custom_call.1} parent=11 // pred_check
          %p271 = pneg %p191
        $region38: #{tpu_custom_call.1} parent=11 // pred_check_branch
          %273 = sbr.rel (%p271) target = $region40
        $region39: #{tpu_custom_call.1} parent=11 // pred_region
          _
        $region40: #{tpu_custom_call.1} parent=11 // pred_fallthru
          _
        // Predicated region
        $region41: #{tpu_custom_call.1} parent=11 // pred_check
          %p274 = pneg %p212
        $region42: #{tpu_custom_call.1} parent=11 // pred_check_branch
          %276 = sbr.rel (%p274) target = $region44
        $region43: #{tpu_custom_call.1} parent=11 // pred_region
          _
        $region44: #{tpu_custom_call.1} parent=11 // pred_fallthru
          _
      $region12: #{tpu_custom_call.1} parent=5 // pred_fallthru
        _
      %p277 = scmp.lt.s32.totalorder %s18, 2
      // Predicated region
      $region45: #{tpu_custom_call.1} parent=5 // pred_check
        %p278 = pneg %p277
      $region46: #{tpu_custom_call.1} parent=5 // pred_check_branch
        %280 = sbr.rel (%p278) target = $region48
      $region47: #{tpu_custom_call.1} parent=5 // pred_region
        // Predicated region
        $region49: #{tpu_custom_call.1} parent=47 // pred_check
          %p281 = pneg %p38
        $region50: #{tpu_custom_call.1} parent=47 // pred_check_branch
          %283 = sbr.rel (%p281) target = $region52
        $region51: #{tpu_custom_call.1} parent=47 // pred_region
          %p284 = scmp.lt.s32.totalorder %s18, 1
          %s285 = scalar_select %p284, %s18, 1
          %s286 = smul.addr %s285, 8
          %s287 = scalar_lea.vmem %s0, %s286
        $region52: #{tpu_custom_call.1} parent=47 // pred_fallthru
          _
      $region48: #{tpu_custom_call.1} parent=5 // pred_fallthru
        _
      %p288 = scmp.le.s32.totalorder 1, %s18
      %p289 = scmp.lt.s32.totalorder %s18, 3
      %p290 = pnand %p288, %p289
      %p291 = pneg %p290
      // Predicated region
      $region53: #{tpu_custom_call.1} parent=5 // pred_check
        _
      $region54: #{tpu_custom_call.1} parent=5 // pred_check_branch
        %293 = sbr.rel (%p290) target = $region56
      $region55: #{tpu_custom_call.1} parent=5 // pred_region
        %s294 = ssub.s32 %s18, 1
        %p295 = scmp.lt.s32.totalorder %s23, 1
        %s296 = scalar_select %p295, %s23, 1
        %s297 = smul.addr %s296, 8
        %s298 = scalar_lea.vmem %s0, %s297
        %p299 = pneg %p44
        %p300 = pneg %p41
        %p301 = pneg %p65
        %p302 = pneg %p62
        %p303 = pneg %p86
        %p304 = pneg %p83
        %p305 = pneg %p107
        %p306 = pneg %p104
        %p307 = pneg %p128
        %p308 = pneg %p125
        %p309 = pneg %p149
        %p310 = pneg %p146
        %p311 = pneg %p170
        %p312 = pneg %p167
        %p313 = pneg %p191
        %p314 = pneg %p188
        %p315 = pneg %p212
        %p316 = pneg %p209
        %p317 = pneg %p238
        %p318 = pneg %p235
        %s319 = sand.u32 %s225, 1
        %s320 = scalar_lea.sflag [#allocation3], %s319
        %s321 = sand.u32 %s225, 1
        %s322 = smul.addr %s321, 8
        %s323 = scalar_lea.vmem [#allocation2], %s322
        %p324 = scmp.lt.s32.totalorder %s23, 1
        %s325 = scalar_select %p324, %s23, 1
        %s326 = smul.addr %s325, 8
        %s327 = scalar_lea.vmem %s0, %s326
        %v328 = vld [vmem:[%s327] sm:$0xff]
        %v329 = vld [vmem:[%s1] sm:$0xff]
        %v330 = vld [vmem:[%s1 + $0x8] sm:$0xff]
        %v331 = vld [vmem:[%s1 + $0x10] sm:$0xff]
        %v332 = vld [vmem:[%s1 + $0x18] sm:$0xff]
        %v333 = vld [vmem:[%s1 + $0x20] sm:$0xff]
        %v334 = vld [vmem:[%s1 + $0x28] sm:$0xff]
        %v335 = vld [vmem:[%s1 + $0x30] sm:$0xff]
        %v336 = vld [vmem:[%s1 + $0x38] sm:$0xff]
        %v337 = vld [vmem:[%s1 + $0x40] sm:$0xff]
        %v338 = vld [vmem:[%s1 + $0x48] sm:$0xff]
        %v339 = vld [vmem:[%s1 + $0x50] sm:$0xff]
        %v340 = vld [vmem:[%s1 + $0x58] sm:$0xff]
        %v341 = vld [vmem:[%s1 + $0x60] sm:$0xff]
        %v342 = vld [vmem:[%s1 + $0x68] sm:$0xff]
        %v343 = vld [vmem:[%s1 + $0x70] sm:$0xff]
        %v344 = vld [vmem:[%s1 + $0x78] sm:$0xff]
        %v345 = vld [vmem:[%s1 + $0x80] sm:$0xff]
        %v346 = vld [vmem:[%s1 + $0x88] sm:$0xff]
        %v347 = vld [vmem:[%s1 + $0x90] sm:$0xff]
        %v348 = vld [vmem:[%s1 + $0x98] sm:$0xff]
        %v349 = vld [vmem:[%s1 + $0xa0] sm:$0xff]
        %v350 = vld [vmem:[%s1 + $0xa8] sm:$0xff]
        %v351 = vld [vmem:[%s1 + $0xb0] sm:$0xff]
        %v352 = vld [vmem:[%s1 + $0xb8] sm:$0xff]
        %v353 = vld [vmem:[%s1 + $0xc0] sm:$0xff]
        %v354 = vld [vmem:[%s1 + $0xc8] sm:$0xff]
        %v355 = vld [vmem:[%s1 + $0xd0] sm:$0xff]
        %v356 = vld [vmem:[%s1 + $0xd8] sm:$0xff]
        %v357 = vld [vmem:[%s1 + $0xe0] sm:$0xff]
        %v358 = vld [vmem:[%s1 + $0xe8] sm:$0xff]
        %v359 = vld [vmem:[%s1 + $0xf0] sm:$0xff]
        %v360 = vld [vmem:[%s1 + $0xf8] sm:$0xff]
        %v361 = vld [vmem:[%s1 + $0x100] sm:$0xff]
        %v362 = vld [vmem:[%s1 + $0x108] sm:$0xff]
        %v363 = vld [vmem:[%s1 + $0x110] sm:$0xff]
        %v364 = vld [vmem:[%s1 + $0x118] sm:$0xff]
        %v365 = vld [vmem:[%s1 + $0x120] sm:$0xff]
        %v366 = vld [vmem:[%s1 + $0x128] sm:$0xff]
        %v367 = vld [vmem:[%s1 + $0x130] sm:$0xff]
        %v368 = vld [vmem:[%s1 + $0x138] sm:$0xff]
        %v369 = vld [vmem:[%s1 + $0x140] sm:$0xff]
        %v370 = vld [vmem:[%s1 + $0x148] sm:$0xff]
        %v371 = vld [vmem:[%s1 + $0x150] sm:$0xff]
        %v372 = vld [vmem:[%s1 + $0x158] sm:$0xff]
        %v373 = vld [vmem:[%s1 + $0x160] sm:$0xff]
        %v374 = vld [vmem:[%s1 + $0x168] sm:$0xff]
        %v375 = vld [vmem:[%s1 + $0x170] sm:$0xff]
        %v376 = vld [vmem:[%s1 + $0x178] sm:$0xff]
        %v377 = vld [vmem:[%s2] sm:$0x7]
        %v379 = vlaneseq
        %v380 = vshrl.u32 %v379, 7
        %v381 = vsub.s32 0, %v380
        %v382 = vrot.slane %v377, %v381
        %v383 = vlaneseq
        %v384 = vshrl.u32 %v383, 7
        %v385 = vsub.s32 1, %v384
        %v386 = vrot.slane %v377, %v385
        %v387 = vlaneseq
        %v388 = vshrl.u32 %v387, 7
        %v389 = vsub.s32 2, %v388
        %v390 = vrot.slane %v377, %v389
        %394 = vmatprep.subr.mxu0 %v375
        %395 = vmatpush1.msra.mxu0 %v374
        %396 = vmatprep.subr.mxu0 %v372
        %397 = vmatpush1.msra.mxu0 %v371
        %398 = vmatprep.subr.mxu0 %v369
        %399 = vmatpush1.msra.mxu0 %v368
        %400 = vmatprep.subr.mxu0 %v366
        %401 = vmatpush1.msra.mxu0 %v365
        %402 = vmatprep.subr.mxu0 %v363
        %403 = vmatpush1.msra.mxu0 %v362
        %404 = vmatprep.subr.mxu0 %v360
        %405 = vmatpush1.msra.mxu0 %v359
        %406 = vmatprep.subr.mxu0 %v357
        %407 = vmatpush1.msra.mxu0 %v356
        %408 = vmatprep.subr.mxu0 %v354
        %409 = vmatpush1.msra.mxu0 %v353
        %410 = vmatprep.subr.mxu0 %v351
        %411 = vmatpush1.msra.mxu0 %v350
        %412 = vmatprep.subr.mxu0 %v348
        %413 = vmatpush1.msra.mxu0 %v347
        %414 = vmatprep.subr.mxu0 %v345
        %415 = vmatpush1.msra.mxu0 %v344
        %416 = vmatprep.subr.mxu0 %v342
        %417 = vmatpush1.msra.mxu0 %v341
        %418 = vmatprep.subr.mxu0 %v339
        %419 = vmatpush1.msra.mxu0 %v338
        %420 = vmatprep.subr.mxu0 %v336
        %421 = vmatpush1.msra.mxu0 %v335
        %422 = vmatprep.subr.mxu0 %v333
        %423 = vmatpush1.msra.mxu0 %v332
        %424 = vmatprep.subr.mxu0 %v330
        %425 = vmatpush1.msra.mxu0 %v329
        %426 = vmatprep.subr.mxu0 0.0
        %427 = vmatpush2.msra.mxu0 0.0
        %428 = vmatprep.subr.mxu0 0.0
        %429 = vmatpush2.msra.mxu0 0.0
        %430 = vmatprep.subr.mxu0 0.0
        %431 = vmatpush2.msra.mxu0 0.0
        %432 = vmatprep.subr.mxu0 0.0
        %433 = vmatpush2.msra.mxu0 0.0
        %434 = vmatprep.subr.mxu0 0.0
        %435 = vmatpush2.msra.mxu0 0.0
        %436 = vmatprep.subr.mxu0 0.0
        %437 = vmatpush2.msra.mxu0 0.0
        %438 = vmatprep.subr.mxu0 0.0
        %439 = vmatpush2.msra.mxu0 0.0
        %440 = vmatprep.subr.mxu0 0.0
        %441 = vmatpush2.msra.mxu0 0.0
        %442 = vmatprep.subr.mxu0 0.0
        %443 = vmatpush2.msra.mxu0 0.0
        %444 = vmatprep.subr.mxu0 0.0
        %445 = vmatpush2.msra.mxu0 0.0
        %446 = vmatprep.subr.mxu0 0.0
        %447 = vmatpush2.msra.mxu0 0.0
        %448 = vmatprep.subr.mxu0 0.0
        %449 = vmatpush2.msra.mxu0 0.0
        %450 = vmatprep.subr.mxu0 0.0
        %451 = vmatpush2.msra.mxu0 0.0
        %452 = vmatprep.subr.mxu0 0.0
        %453 = vmatpush2.msra.mxu0 0.0
        %454 = vmatprep.subr.mxu0 0.0
        %455 = vmatpush2.msra.mxu0 0.0
        %456 = vmatprep.subr.mxu0 0.0
        %457 = vmatpush2.msra.mxu0 0.0
        %458 = vmatprep.mubr.f32.mxu0 0.0
        %459 = vmatmul.mubr.f32.gmra.mxu0 %v328
        %v460 = vpop.f32.mrf.mxu0
        %v461 = vadd.f32 %v382, %v460
        %v462 = vpop.f32.mrf.mxu0
        %v463 = vadd.f32 %v386, %v462
        %464 = vdwg.mxu0
        %465 = vmatprep.subr.mxu0 0.0
        %466 = vmatpush1.msra.mxu0 %v376
        %467 = vmatprep.subr.mxu0 0.0
        %468 = vmatpush1.msra.mxu0 %v373
        %469 = vmatprep.subr.mxu0 0.0
        %470 = vmatpush1.msra.mxu0 %v370
        %471 = vmatprep.subr.mxu0 0.0
        %472 = vmatpush1.msra.mxu0 %v367
        %473 = vmatprep.subr.mxu0 0.0
        %474 = vmatpush1.msra.mxu0 %v364
        %475 = vmatprep.subr.mxu0 0.0
        %476 = vmatpush1.msra.mxu0 %v361
        %477 = vmatprep.subr.mxu0 0.0
        %478 = vmatpush1.msra.mxu0 %v358
        %479 = vmatprep.subr.mxu0 0.0
        %480 = vmatpush1.msra.mxu0 %v355
        %481 = vmatprep.subr.mxu0 0.0
        %482 = vmatpush1.msra.mxu0 %v352
        %483 = vmatprep.subr.mxu0 0.0
        %484 = vmatpush1.msra.mxu0 %v349
        %485 = vmatprep.subr.mxu0 0.0
        %486 = vmatpush1.msra.mxu0 %v346
        %487 = vmatprep.subr.mxu0 0.0
        %488 = vmatpush1.msra.mxu0 %v343
        %489 = vmatprep.subr.mxu0 0.0
        %490 = vmatpush1.msra.mxu0 %v340
        %491 = vmatprep.subr.mxu0 0.0
        %492 = vmatpush1.msra.mxu0 %v337
        %493 = vmatprep.subr.mxu0 0.0
        %494 = vmatpush1.msra.mxu0 %v334
        %495 = vmatprep.subr.mxu0 0.0
        %496 = vmatpush1.msra.mxu0 %v331
        %497 = vmatprep.subr.mxu0 0.0
        %498 = vmatpush2.msra.mxu0 0.0
        %499 = vmatprep.subr.mxu0 0.0
        %500 = vmatpush2.msra.mxu0 0.0
        %501 = vmatprep.subr.mxu0 0.0
        %502 = vmatpush2.msra.mxu0 0.0
        %503 = vmatprep.subr.mxu0 0.0
        %504 = vmatpush2.msra.mxu0 0.0
        %505 = vmatprep.subr.mxu0 0.0
        %506 = vmatpush2.msra.mxu0 0.0
        %507 = vmatprep.subr.mxu0 0.0
        %508 = vmatpush2.msra.mxu0 0.0
        %509 = vmatprep.subr.mxu0 0.0
        %510 = vmatpush2.msra.mxu0 0.0
        %511 = vmatprep.subr.mxu0 0.0
        %512 = vmatpush2.msra.mxu0 0.0
        %513 = vmatprep.subr.mxu0 0.0
        %514 = vmatpush2.msra.mxu0 0.0
        %515 = vmatprep.subr.mxu0 0.0
        %516 = vmatpush2.msra.mxu0 0.0
        %517 = vmatprep.subr.mxu0 0.0
        %518 = vmatpush2.msra.mxu0 0.0
        %519 = vmatprep.subr.mxu0 0.0
        %520 = vmatpush2.msra.mxu0 0.0
        %521 = vmatprep.subr.mxu0 0.0
        %522 = vmatpush2.msra.mxu0 0.0
        %523 = vmatprep.subr.mxu0 0.0
        %524 = vmatpush2.msra.mxu0 0.0
        %525 = vmatprep.subr.mxu0 0.0
        %526 = vmatpush2.msra.mxu0 0.0
        %527 = vmatprep.subr.mxu0 0.0
        %528 = vmatpush2.msra.mxu0 0.0
        %529 = vmatprep.mubr.f32.mxu0 0.0
        %530 = vmatmul.mubr.f32.gmra.mxu0 %v328
        %v531 = vpop.f32.mrf.mxu0
        %v532 = vadd.f32 %v390, %v531
        %v533 = vpop.f32.mrf.mxu0
        %534 = vdwg.mxu0
        %vm535 = vcmp.gt.f32.partialorder %v461, 0.0
        %vm536 = vcmp.gt.f32.partialorder %v463, 0.0
        %vm537 = vcmp.gt.f32.partialorder %v532, 0.0
        %v538 = vmin.f32 %v461, 0.0
        %v539 = vmin.f32 %v463, 0.0
        %v540 = vmin.f32 %v532, 0.0
        %v541 = vmul.f32 %v538, 1.442695
        %v542 = vpow.pop %v541
        %v543 = vmul.f32 %v539, 1.442695
        %v544 = vpow.pop %v543
        %v545 = vmul.f32 %v540, 1.442695
        %v546 = vpow.pop %v545
        %v547 = vsub.f32 %v542, 1.0
        %v548 = vsub.f32 %v544, 1.0
        %v549 = vsub.f32 %v546, 1.0
        %v550 = vsel %vm535, %v461, %v547
        %v551 = vsel %vm536, %v463, %v548
        %v552 = vsel %vm537, %v532, %v549
        %v553 = vld [vmem:[%s3] sm:$0xff]
        %v554 = vld [vmem:[%s3 + $0x8] sm:$0xff]
        %v555 = vld [vmem:[%s3 + $0x10] sm:$0xff]
        %v556 = vld [vmem:[%s3 + $0x18] sm:$0xff]
        %v557 = vld [vmem:[%s3 + $0x20] sm:$0xff]
        %v558 = vld [vmem:[%s3 + $0x28] sm:$0xff]
        %v559 = vld [vmem:[%s3 + $0x30] sm:$0xff]
        %v560 = vld [vmem:[%s3 + $0x38] sm:$0xff]
        %v561 = vld [vmem:[%s3 + $0x40] sm:$0xff]
        %v562 = vld [vmem:[%s3 + $0x48] sm:$0xff]
        %v563 = vld [vmem:[%s3 + $0x50] sm:$0xff]
        %v564 = vld [vmem:[%s3 + $0x58] sm:$0xff]
        %v565 = vld [vmem:[%s3 + $0x60] sm:$0xff]
        %v566 = vld [vmem:[%s3 + $0x68] sm:$0xff]
        %v567 = vld [vmem:[%s3 + $0x70] sm:$0xff]
        %v568 = vld [vmem:[%s3 + $0x78] sm:$0xff]
        %v569 = vld [vmem:[%s3 + $0x80] sm:$0xff]
        %v570 = vld [vmem:[%s3 + $0x88] sm:$0xff]
        %v571 = vld [vmem:[%s3 + $0x90] sm:$0xff]
        %v572 = vld [vmem:[%s3 + $0x98] sm:$0xff]
        %v573 = vld [vmem:[%s3 + $0xa0] sm:$0xff]
        %v574 = vld [vmem:[%s3 + $0xa8] sm:$0xff]
        %v575 = vld [vmem:[%s3 + $0xb0] sm:$0xff]
        %v576 = vld [vmem:[%s3 + $0xb8] sm:$0xff]
        %v577 = vld [vmem:[%s3 + $0xc0] sm:$0xff]
        %v578 = vld [vmem:[%s3 + $0xc8] sm:$0xff]
        %v579 = vld [vmem:[%s3 + $0xd0] sm:$0xff]
        %v580 = vld [vmem:[%s3 + $0xd8] sm:$0xff]
        %v581 = vld [vmem:[%s3 + $0xe0] sm:$0xff]
        %v582 = vld [vmem:[%s3 + $0xe8] sm:$0xff]
        %v583 = vld [vmem:[%s3 + $0xf0] sm:$0xff]
        %v584 = vld [vmem:[%s3 + $0xf8] sm:$0xff]
        %v585 = vld [vmem:[%s3 + $0x100] sm:$0xff]
        %v586 = vld [vmem:[%s3 + $0x108] sm:$0xff]
        %v587 = vld [vmem:[%s3 + $0x110] sm:$0xff]
        %v588 = vld [vmem:[%s3 + $0x118] sm:$0xff]
        %v589 = vld [vmem:[%s3 + $0x120] sm:$0xff]
        %v590 = vld [vmem:[%s3 + $0x128] sm:$0xff]
        %v591 = vld [vmem:[%s3 + $0x130] sm:$0xff]
        %v592 = vld [vmem:[%s3 + $0x138] sm:$0xff]
        %v593 = vld [vmem:[%s4] sm:$0x1]
        %v595 = vlaneseq
        %v596 = vshrl.u32 %v595, 7
        %v597 = vsub.s32 0, %v596
        %v598 = vrot.slane %v593, %v597
        %vm600 = vcmask 523264
        %v602 = vsel %vm600, %v552, 0
        %604 = vmatprep.subr.mxu0 0.0
        %605 = vmatpush1.msra.mxu0 %v568
        %606 = vmatprep.subr.mxu0 0.0
        %607 = vmatpush1.msra.mxu0 %v567
        %608 = vmatprep.subr.mxu0 0.0
        %609 = vmatpush1.msra.mxu0 %v566
        %610 = vmatprep.subr.mxu0 0.0
        %611 = vmatpush1.msra.mxu0 %v565
        %612 = vmatprep.subr.mxu0 0.0
        %613 = vmatpush1.msra.mxu0 %v564
        %614 = vmatprep.subr.mxu0 0.0
        %615 = vmatpush1.msra.mxu0 %v563
        %616 = vmatprep.subr.mxu0 0.0
        %617 = vmatpush1.msra.mxu0 %v562
        %618 = vmatprep.subr.mxu0 0.0
        %619 = vmatpush1.msra.mxu0 %v561
        %620 = vmatprep.subr.mxu0 0.0
        %621 = vmatpush1.msra.mxu0 %v560
        %622 = vmatprep.subr.mxu0 0.0
        %623 = vmatpush1.msra.mxu0 %v559
        %624 = vmatprep.subr.mxu0 0.0
        %625 = vmatpush1.msra.mxu0 %v558
        %626 = vmatprep.subr.mxu0 0.0
        %627 = vmatpush1.msra.mxu0 %v557
        %628 = vmatprep.subr.mxu0 0.0
        %629 = vmatpush1.msra.mxu0 %v556
        %630 = vmatprep.subr.mxu0 0.0
        %631 = vmatpush1.msra.mxu0 %v555
        %632 = vmatprep.subr.mxu0 0.0
        %633 = vmatpush1.msra.mxu0 %v554
        %634 = vmatprep.subr.mxu0 0.0
        %635 = vmatpush1.msra.mxu0 %v553
        %636 = vmatprep.subr.mxu0 0.0
        %637 = vmatpush2.msra.mxu0 %v584
        %638 = vmatprep.subr.mxu0 0.0
        %639 = vmatpush2.msra.mxu0 %v583
        %640 = vmatprep.subr.mxu0 0.0
        %641 = vmatpush2.msra.mxu0 %v582
        %642 = vmatprep.subr.mxu0 0.0
        %643 = vmatpush2.msra.mxu0 %v581
        %644 = vmatprep.subr.mxu0 0.0
        %645 = vmatpush2.msra.mxu0 %v580
        %646 = vmatprep.subr.mxu0 0.0
        %647 = vmatpush2.msra.mxu0 %v579
        %648 = vmatprep.subr.mxu0 0.0
        %649 = vmatpush2.msra.mxu0 %v578
        %650 = vmatprep.subr.mxu0 0.0
        %651 = vmatpush2.msra.mxu0 %v577
        %652 = vmatprep.subr.mxu0 0.0
        %653 = vmatpush2.msra.mxu0 %v576
        %654 = vmatprep.subr.mxu0 0.0
        %655 = vmatpush2.msra.mxu0 %v575
        %656 = vmatprep.subr.mxu0 0.0
        %657 = vmatpush2.msra.mxu0 %v574
        %658 = vmatprep.subr.mxu0 0.0
        %659 = vmatpush2.msra.mxu0 %v573
        %660 = vmatprep.subr.mxu0 0.0
        %661 = vmatpush2.msra.mxu0 %v572
        %662 = vmatprep.subr.mxu0 0.0
        %663 = vmatpush2.msra.mxu0 %v571
        %664 = vmatprep.subr.mxu0 0.0
        %665 = vmatpush2.msra.mxu0 %v570
        %666 = vmatprep.subr.mxu0 0.0
        %667 = vmatpush2.msra.mxu0 %v569
        %668 = vmatprep.mubr.f32.mxu0 %v551
        %669 = vmatmul.mubr.f32.gmra.mxu0 %v550
        %v670 = vpop.f32.mrf.mxu0
        %v671 = vadd.f32 %v598, %v670
        %v672 = vpop.f32.mrf.mxu0
        %673 = vdwg.mxu0
        %674 = vmatprep.subr.mxu0 0.0
        %675 = vmatpush1.msra.mxu0 0.0
        %676 = vmatprep.subr.mxu0 0.0
        %677 = vmatpush1.msra.mxu0 0.0
        %678 = vmatprep.subr.mxu0 0.0
        %679 = vmatpush1.msra.mxu0 0.0
        %680 = vmatprep.subr.mxu0 0.0
        %681 = vmatpush1.msra.mxu0 0.0
        %682 = vmatprep.subr.mxu0 0.0
        %683 = vmatpush1.msra.mxu0 0.0
        %684 = vmatprep.subr.mxu0 0.0
        %685 = vmatpush1.msra.mxu0 0.0
        %686 = vmatprep.subr.mxu0 0.0
        %687 = vmatpush1.msra.mxu0 0.0
        %688 = vmatprep.subr.mxu0 0.0
        %689 = vmatpush1.msra.mxu0 0.0
        %690 = vmatprep.subr.mxu0 0.0
        %691 = vmatpush1.msra.mxu0 %v592
        %692 = vmatprep.subr.mxu0 0.0
        %693 = vmatpush1.msra.mxu0 %v591
        %694 = vmatprep.subr.mxu0 0.0
        %695 = vmatpush1.msra.mxu0 %v590
        %696 = vmatprep.subr.mxu0 0.0
        %697 = vmatpush1.msra.mxu0 %v589
        %698 = vmatprep.subr.mxu0 0.0
        %699 = vmatpush1.msra.mxu0 %v588
        %700 = vmatprep.subr.mxu0 0.0
        %701 = vmatpush1.msra.mxu0 %v587
        %702 = vmatprep.subr.mxu0 0.0
        %703 = vmatpush1.msra.mxu0 %v586
        %704 = vmatprep.subr.mxu0 0.0
        %705 = vmatpush1.msra.mxu0 %v585
        %706 = vmatprep.subr.mxu0 0.0
        %707 = vmatpush2.msra.mxu0 0.0
        %708 = vmatprep.subr.mxu0 0.0
        %709 = vmatpush2.msra.mxu0 0.0
        %710 = vmatprep.subr.mxu0 0.0
        %711 = vmatpush2.msra.mxu0 0.0
        %712 = vmatprep.subr.mxu0 0.0
        %713 = vmatpush2.msra.mxu0 0.0
        %714 = vmatprep.subr.mxu0 0.0
        %715 = vmatpush2.msra.mxu0 0.0
        %716 = vmatprep.subr.mxu0 0.0
        %717 = vmatpush2.msra.mxu0 0.0
        %718 = vmatprep.subr.mxu0 0.0
        %719 = vmatpush2.msra.mxu0 0.0
        %720 = vmatprep.subr.mxu0 0.0
        %721 = vmatpush2.msra.mxu0 0.0
        %722 = vmatprep.subr.mxu0 0.0
        %723 = vmatpush2.msra.mxu0 0.0
        %724 = vmatprep.subr.mxu0 0.0
        %725 = vmatpush2.msra.mxu0 0.0
        %726 = vmatprep.subr.mxu0 0.0
        %727 = vmatpush2.msra.mxu0 0.0
        %728 = vmatprep.subr.mxu0 0.0
        %729 = vmatpush2.msra.mxu0 0.0
        %730 = vmatprep.subr.mxu0 0.0
        %731 = vmatpush2.msra.mxu0 0.0
        %732 = vmatprep.subr.mxu0 0.0
        %733 = vmatpush2.msra.mxu0 0.0
        %734 = vmatprep.subr.mxu0 0.0
        %735 = vmatpush2.msra.mxu0 0.0
        %736 = vmatprep.subr.mxu0 0.0
        %737 = vmatpush2.msra.mxu0 0.0
        %738 = vmatprep.mubr.f32.mxu0 0.0
        %739 = vmatmul.mubr.f32.gmra.mxu0 %v602
        %v740 = vpop.f32.mrf.mxu0
        %v741 = vadd.f32 %v671, %v740
        %v742 = vpop.f32.mrf.mxu0
        %743 = vdwg.mxu0
        %v744 = vand.u32 2147483647, %v741
        %v745 = vld [vmem:[%s5] sm:$0xff]
        %v746 = vld [vmem:[%s5 + $0x8] sm:$0xff]
        %v747 = vld [vmem:[%s5 + $0x10] sm:$0xff]
        %v748 = vld [vmem:[%s5 + $0x18] sm:$0xff]
        %v749 = vld [vmem:[%s5 + $0x20] sm:$0xff]
        %v750 = vld [vmem:[%s5 + $0x28] sm:$0xff]
        %v751 = vld [vmem:[%s5 + $0x30] sm:$0xff]
        %v752 = vld [vmem:[%s5 + $0x38] sm:$0xff]
        %v753 = vld [vmem:[%s5 + $0x40] sm:$0xff]
        %v754 = vld [vmem:[%s5 + $0x48] sm:$0xff]
        %v755 = vld [vmem:[%s5 + $0x50] sm:$0xff]
        %v756 = vld [vmem:[%s5 + $0x58] sm:$0xff]
        %v757 = vld [vmem:[%s5 + $0x60] sm:$0xff]
        %v758 = vld [vmem:[%s5 + $0x68] sm:$0xff]
        %v759 = vld [vmem:[%s5 + $0x70] sm:$0xff]
        %v760 = vld [vmem:[%s5 + $0x78] sm:$0xff]
        %761 = vmatprep.subr.mxu0 0.0
        %762 = vmatpush1.msra.mxu0 %v760
        %763 = vmatprep.subr.mxu0 0.0
        %764 = vmatpush1.msra.mxu0 %v759
        %765 = vmatprep.subr.mxu0 0.0
        %766 = vmatpush1.msra.mxu0 %v758
        %767 = vmatprep.subr.mxu0 0.0
        %768 = vmatpush1.msra.mxu0 %v757
        %769 = vmatprep.subr.mxu0 0.0
        %770 = vmatpush1.msra.mxu0 %v756
        %771 = vmatprep.subr.mxu0 0.0
        %772 = vmatpush1.msra.mxu0 %v755
        %773 = vmatprep.subr.mxu0 0.0
        %774 = vmatpush1.msra.mxu0 %v754
        %775 = vmatprep.subr.mxu0 0.0
        %776 = vmatpush1.msra.mxu0 %v753
        %777 = vmatprep.subr.mxu0 0.0
        %778 = vmatpush1.msra.mxu0 %v752
        %779 = vmatprep.subr.mxu0 0.0
        %780 = vmatpush1.msra.mxu0 %v751
        %781 = vmatprep.subr.mxu0 0.0
        %782 = vmatpush1.msra.mxu0 %v750
        %783 = vmatprep.subr.mxu0 0.0
        %784 = vmatpush1.msra.mxu0 %v749
        %785 = vmatprep.subr.mxu0 0.0
        %786 = vmatpush1.msra.mxu0 %v748
        %787 = vmatprep.subr.mxu0 0.0
        %788 = vmatpush1.msra.mxu0 %v747
        %789 = vmatprep.subr.mxu0 0.0
        %790 = vmatpush1.msra.mxu0 %v746
        %791 = vmatprep.subr.mxu0 0.0
        %792 = vmatpush1.msra.mxu0 %v745
        %793 = vmatprep.subr.mxu0 0.0
        %794 = vmatpush2.msra.mxu0 0.0
        %795 = vmatprep.subr.mxu0 0.0
        %796 = vmatpush2.msra.mxu0 0.0
        %797 = vmatprep.subr.mxu0 0.0
        %798 = vmatpush2.msra.mxu0 0.0
        %799 = vmatprep.subr.mxu0 0.0
        %800 = vmatpush2.msra.mxu0 0.0
        %801 = vmatprep.subr.mxu0 0.0
        %802 = vmatpush2.msra.mxu0 0.0
        %803 = vmatprep.subr.mxu0 0.0
        %804 = vmatpush2.msra.mxu0 0.0
        %805 = vmatprep.subr.mxu0 0.0
        %806 = vmatpush2.msra.mxu0 0.0
        %807 = vmatprep.subr.mxu0 0.0
        %808 = vmatpush2.msra.mxu0 0.0
        %809 = vmatprep.subr.mxu0 0.0
        %810 = vmatpush2.msra.mxu0 0.0
        %811 = vmatprep.subr.mxu0 0.0
        %812 = vmatpush2.msra.mxu0 0.0
        %813 = vmatprep.subr.mxu0 0.0
        %814 = vmatpush2.msra.mxu0 0.0
        %815 = vmatprep.subr.mxu0 0.0
        %816 = vmatpush2.msra.mxu0 0.0
        %817 = vmatprep.subr.mxu0 0.0
        %818 = vmatpush2.msra.mxu0 0.0
        %819 = vmatprep.subr.mxu0 0.0
        %820 = vmatpush2.msra.mxu0 0.0
        %821 = vmatprep.subr.mxu0 0.0
        %822 = vmatpush2.msra.mxu0 0.0
        %823 = vmatprep.subr.mxu0 0.0
        %824 = vmatpush2.msra.mxu0 0.0
        %825 = vmatprep.mubr.f32.mxu0 0.0
        %826 = vmatmul.mubr.f32.gmra.mxu0 %v328
        %v827 = vpop.f32.mrf.mxu0
        %v828 = vadd.f32 0.0, %v827
        %v829 = vpop.f32.mrf.mxu0
        %830 = vdwg.mxu0
        %v831 = vld [vmem:[%s6] sm:$0xff]
        %v832 = vld [vmem:[%s6 + $0x8] sm:$0xff]
        %v833 = vld [vmem:[%s6 + $0x10] sm:$0xff]
        %v834 = vld [vmem:[%s6 + $0x18] sm:$0xff]
        %v835 = vld [vmem:[%s6 + $0x20] sm:$0xff]
        %v836 = vld [vmem:[%s6 + $0x28] sm:$0xff]
        %v837 = vld [vmem:[%s6 + $0x30] sm:$0xff]
        %v838 = vld [vmem:[%s6 + $0x38] sm:$0xff]
        %v839 = vld [vmem:[%s6 + $0x40] sm:$0xff]
        %v840 = vld [vmem:[%s6 + $0x48] sm:$0xff]
        %v841 = vld [vmem:[%s6 + $0x50] sm:$0xff]
        %v842 = vld [vmem:[%s6 + $0x58] sm:$0xff]
        %v843 = vld [vmem:[%s6 + $0x60] sm:$0xff]
        %v844 = vld [vmem:[%s6 + $0x68] sm:$0xff]
        %v845 = vld [vmem:[%s6 + $0x70] sm:$0xff]
        %v846 = vld [vmem:[%s6 + $0x78] sm:$0xff]
        %v847 = vld [vmem:[%s7] sm:$0x1]
        %v849 = vlaneseq
        %v850 = vshrl.u32 %v849, 7
        %v851 = vsub.s32 0, %v850
        %v852 = vrot.slane %v847, %v851
        %854 = vmatprep.subr.mxu0 0.0
        %855 = vmatpush1.msra.mxu0 %v846
        %856 = vmatprep.subr.mxu0 0.0
        %857 = vmatpush1.msra.mxu0 %v845
        %858 = vmatprep.subr.mxu0 0.0
        %859 = vmatpush1.msra.mxu0 %v844
        %860 = vmatprep.subr.mxu0 0.0
        %861 = vmatpush1.msra.mxu0 %v843
        %862 = vmatprep.subr.mxu0 0.0
        %863 = vmatpush1.msra.mxu0 %v842
        %864 = vmatprep.subr.mxu0 0.0
        %865 = vmatpush1.msra.mxu0 %v841
        %866 = vmatprep.subr.mxu0 0.0
        %867 = vmatpush1.msra.mxu0 %v840
        %868 = vmatprep.subr.mxu0 0.0
        %869 = vmatpush1.msra.mxu0 %v839
        %870 = vmatprep.subr.mxu0 0.0
        %871 = vmatpush1.msra.mxu0 %v838
        %872 = vmatprep.subr.mxu0 0.0
        %873 = vmatpush1.msra.mxu0 %v837
        %874 = vmatprep.subr.mxu0 0.0
        %875 = vmatpush1.msra.mxu0 %v836
        %876 = vmatprep.subr.mxu0 0.0
        %877 = vmatpush1.msra.mxu0 %v835
        %878 = vmatprep.subr.mxu0 0.0
        %879 = vmatpush1.msra.mxu0 %v834
        %880 = vmatprep.subr.mxu0 0.0
        %881 = vmatpush1.msra.mxu0 %v833
        %882 = vmatprep.subr.mxu0 0.0
        %883 = vmatpush1.msra.mxu0 %v832
        %884 = vmatprep.subr.mxu0 0.0
        %885 = vmatpush1.msra.mxu0 %v831
        %886 = vmatprep.subr.mxu0 0.0
        %887 = vmatpush2.msra.mxu0 0.0
        %888 = vmatprep.subr.mxu0 0.0
        %889 = vmatpush2.msra.mxu0 0.0
        %890 = vmatprep.subr.mxu0 0.0
        %891 = vmatpush2.msra.mxu0 0.0
        %892 = vmatprep.subr.mxu0 0.0
        %893 = vmatpush2.msra.mxu0 0.0
        %894 = vmatprep.subr.mxu0 0.0
        %895 = vmatpush2.msra.mxu0 0.0
        %896 = vmatprep.subr.mxu0 0.0
        %897 = vmatpush2.msra.mxu0 0.0
        %898 = vmatprep.subr.mxu0 0.0
        %899 = vmatpush2.msra.mxu0 0.0
        %900 = vmatprep.subr.mxu0 0.0
        %901 = vmatpush2.msra.mxu0 0.0
        %902 = vmatprep.subr.mxu0 0.0
        %903 = vmatpush2.msra.mxu0 0.0
        %904 = vmatprep.subr.mxu0 0.0
        %905 = vmatpush2.msra.mxu0 0.0
        %906 = vmatprep.subr.mxu0 0.0
        %907 = vmatpush2.msra.mxu0 0.0
        %908 = vmatprep.subr.mxu0 0.0
        %909 = vmatpush2.msra.mxu0 0.0
        %910 = vmatprep.subr.mxu0 0.0
        %911 = vmatpush2.msra.mxu0 0.0
        %912 = vmatprep.subr.mxu0 0.0
        %913 = vmatpush2.msra.mxu0 0.0
        %914 = vmatprep.subr.mxu0 0.0
        %915 = vmatpush2.msra.mxu0 0.0
        %916 = vmatprep.subr.mxu0 0.0
        %917 = vmatpush2.msra.mxu0 0.0
        %918 = vmatprep.mubr.f32.mxu0 0.0
        %919 = vmatmul.mubr.f32.gmra.mxu0 %v328
        %v920 = vpop.f32.mrf.mxu0
        %v921 = vadd.f32 %v852, %v920
        %v922 = vpop.f32.mrf.mxu0
        %923 = vdwg.mxu0
        %v924 = vmul.f32 %v744, %v828
        %v925 = vmul.f32 %v924, %v921
        %v926 = vld [vmem:[%s8] sm:$0xff]
        %v927 = vld [vmem:[%s8 + $0x8] sm:$0xff]
        %v928 = vld [vmem:[%s8 + $0x10] sm:$0xff]
        %v929 = vld [vmem:[%s8 + $0x18] sm:$0xff]
        %vm930 = vcmask 261120
        %v932 = vsel %vm930, %v925, 0
        %934 = vmatprep.subr.mxu0 0.0
        %935 = vmatpush1.msra.mxu0 0.0
        %936 = vmatprep.subr.mxu0 0.0
        %937 = vmatpush1.msra.mxu0 0.0
        %938 = vmatprep.subr.mxu0 0.0
        %939 = vmatpush1.msra.mxu0 0.0
        %940 = vmatprep.subr.mxu0 0.0
        %941 = vmatpush1.msra.mxu0 0.0
        %942 = vmatprep.subr.mxu0 0.0
        %943 = vmatpush1.msra.mxu0 0.0
        %944 = vmatprep.subr.mxu0 0.0
        %945 = vmatpush1.msra.mxu0 0.0
        %946 = vmatprep.subr.mxu0 0.0
        %947 = vmatpush1.msra.mxu0 0.0
        %948 = vmatprep.subr.mxu0 0.0
        %949 = vmatpush1.msra.mxu0 0.0
        %950 = vmatprep.subr.mxu0 0.0
        %951 = vmatpush1.msra.mxu0 0.0
        %952 = vmatprep.subr.mxu0 0.0
        %953 = vmatpush1.msra.mxu0 0.0
        %954 = vmatprep.subr.mxu0 0.0
        %955 = vmatpush1.msra.mxu0 0.0
        %956 = vmatprep.subr.mxu0 0.0
        %957 = vmatpush1.msra.mxu0 0.0
        %958 = vmatprep.subr.mxu0 0.0
        %959 = vmatpush1.msra.mxu0 %v929
        %960 = vmatprep.subr.mxu0 0.0
        %961 = vmatpush1.msra.mxu0 %v928
        %962 = vmatprep.subr.mxu0 0.0
        %963 = vmatpush1.msra.mxu0 %v927
        %964 = vmatprep.subr.mxu0 0.0
        %965 = vmatpush1.msra.mxu0 %v926
        %966 = vmatprep.subr.mxu0 0.0
        %967 = vmatpush2.msra.mxu0 0.0
        %968 = vmatprep.subr.mxu0 0.0
        %969 = vmatpush2.msra.mxu0 0.0
        %970 = vmatprep.subr.mxu0 0.0
        %971 = vmatpush2.msra.mxu0 0.0
        %972 = vmatprep.subr.mxu0 0.0
        %973 = vmatpush2.msra.mxu0 0.0
        %974 = vmatprep.subr.mxu0 0.0
        %975 = vmatpush2.msra.mxu0 0.0
        %976 = vmatprep.subr.mxu0 0.0
        %977 = vmatpush2.msra.mxu0 0.0
        %978 = vmatprep.subr.mxu0 0.0
        %979 = vmatpush2.msra.mxu0 0.0
        %980 = vmatprep.subr.mxu0 0.0
        %981 = vmatpush2.msra.mxu0 0.0
        %982 = vmatprep.subr.mxu0 0.0
        %983 = vmatpush2.msra.mxu0 0.0
        %984 = vmatprep.subr.mxu0 0.0
        %985 = vmatpush2.msra.mxu0 0.0
        %986 = vmatprep.subr.mxu0 0.0
        %987 = vmatpush2.msra.mxu0 0.0
        %988 = vmatprep.subr.mxu0 0.0
        %989 = vmatpush2.msra.mxu0 0.0
        %990 = vmatprep.subr.mxu0 0.0
        %991 = vmatpush2.msra.mxu0 0.0
        %992 = vmatprep.subr.mxu0 0.0
        %993 = vmatpush2.msra.mxu0 0.0
        %994 = vmatprep.subr.mxu0 0.0
        %995 = vmatpush2.msra.mxu0 0.0
        %996 = vmatprep.subr.mxu0 0.0
        %997 = vmatpush2.msra.mxu0 0.0
        %998 = vmatprep.mubr.f32.mxu0 0.0
        %999 = vmatmul.mubr.f32.gmra.mxu0 %v932
        %v1000 = vpop.f32.mrf.mxu0
        %v1001 = vadd.f32 0.0, %v1000
        %v1002 = vpop.f32.mrf.mxu0
        %1003 = vdwg.mxu0
        %vm1004 = vcmp.gt.f32.partialorder %v328, 2.0
        %vm1005 = vcmp.lt.f32.partialorder %v328, -1.0
        %vm1006 = vmor %vm1004, %vm1005
        %v1007 = vsel %vm1006, 0.0, %v1001
        %1008 = vst [vmem:[%s323] sm:$0xff] %v1007
        %s1009 = sand.u32 %s225, 1
        %s1010 = scalar_lea.sflag [#allocation3], %s1009
        %s1011 = sand.u32 %s225, 1
        %s1012 = smul.addr %s1011, 8
        %s1013 = scalar_lea.vmem [#allocation2], %s1012
        // Predicated region
        $region57: #{tpu_custom_call.1} parent=55 // pred_check
          %p1014 = pneg %p235
        $region58: #{tpu_custom_call.1} parent=55 // pred_check_branch
          %1016 = sbr.rel (%p1014) target = $region60
        $region59: #{tpu_custom_call.1} parent=55 // pred_region
          %s1018 = ssub.s32 128, 128
          %1019 = vsyncadd %s1010, %s1018
          %s1020 = smul.addr %s23, 128
          %s1021 = scalar_lea.hbm %s9, %s1020
          %s1023 = sshll.u32 %s1013, 4
          %s1024 = int_to_ptr.vmem [resolvable:$true] %s1023
          %1026 = dma.vmem_to_hbm [thread:$0]  %s1024, 128, %s1021, %s1010
        $region60: #{tpu_custom_call.1} parent=55 // pred_fallthru
          _
      $region56: #{tpu_custom_call.1} parent=5 // pred_fallthru
        _
      %p1027 = scmp.le.s32.totalorder 2, %s18
      // Predicated region
      $region61: #{tpu_custom_call.1} parent=5 // pred_check
        %p1028 = pneg %p1027
      $region62: #{tpu_custom_call.1} parent=5 // pred_check_branch
        %1030 = sbr.rel (%p1028) target = $region64
      $region63: #{tpu_custom_call.1} parent=5 // pred_region
        %s1031 = ssub.s32 %s18, 2
        // Predicated region
        $region65: #{tpu_custom_call.1} parent=63 // pred_check
          %p1032 = pneg %p241
        $region66: #{tpu_custom_call.1} parent=63 // pred_check_branch
          %1034 = sbr.rel (%p1032) target = $region68
        $region67: #{tpu_custom_call.1} parent=63 // pred_region
          %s1035 = sand.u32 %s226, 1
          %s1036 = scalar_lea.sflag [#allocation3], %s1035
          %s1037 = sand.u32 %s226, 1
          %s1038 = smul.addr %s1037, 8
          %s1039 = scalar_lea.vmem [#allocation2], %s1038
          %1040 = dma.done %s1036, 128
        $region68: #{tpu_custom_call.1} parent=63 // pred_fallthru
          _
      $region64: #{tpu_custom_call.1} parent=5 // pred_fallthru
        _
    $region6: #{tpu_custom_call.1} parent=1 // loop_footer
      %s22 = sadd.s32 1, %s18
    $region7: #{tpu_custom_call.1} parent=1 // loop_footer_branch
      %17 = sbr.rel target = $region3
    $region8: #{tpu_custom_call.1} parent=1 // loop_exit
      _
    %1041 = vsyncpa [#allocation3], 1
    %s1042 = scalar_lea.sflag [#allocation3], 1
    %1043 = vsyncpa %s1042, 1

</llo_original>
